<compile_context>
chip_gen: v7x
topology: tpu7x:2x2x1
jax: 0.10.0
libtpu: 0.0.40
codegen_flags: <defaults>
</compile_context>

<pallas_src>
import functools

import jax
import jax.numpy as jnp
from jax.experimental import pallas as pl
from jax.experimental.pallas import tpu as pltpu


def se_block_kernel(alpha_ref,   # SMEM (1,)        PReLU slope
                    x_ref,       # VMEM (TB, C, HW)
                    w1t_ref,     # VMEM (C, hid)    = torch w1.T
                    b1_ref,      # VMEM (1, hid)
                    w2t_ref,     # VMEM (hid, C)    = torch w2.T
                    b2_ref,      # VMEM (1, C)
                    out_ref,     # VMEM (TB, C, HW)
                    *, inv_hw):  # 1 / (H*W), static
    x = x_ref[...]                                           # (TB, C, HW), input dtype

    # --- squeeze: global average pool over spatial (f32 accumulation) ---
    y = jnp.sum(x, axis=-1, dtype=jnp.float32) * inv_hw      # (TB, C) f32

    # --- excitation: Linear -> PReLU -> Linear -> Sigmoid (tiny, off roofline) ---
    h = jnp.dot(y, w1t_ref[...], preferred_element_type=jnp.float32) + b1_ref[...]
    alpha = alpha_ref[0]
    h = jnp.where(h > 0, h, alpha * h)                       # PReLU, shared slope
    s = jnp.dot(h, w2t_ref[...], preferred_element_type=jnp.float32) + b2_ref[...]
    s = jax.nn.sigmoid(s)                                    # (TB, C) f32

    # --- scale: multiply in the input dtype, broadcast gate over spatial ---
    out_ref[...] = (x * s[:, :, None].astype(x.dtype)).astype(out_ref.dtype)


def _pick_batch_tile(B, per_image_bytes, target_tile_bytes=1 << 20):
    """Largest divisor of B giving an x tile <= ~target and grid >= 2 (if B >= 2)."""
    cap = max(1, target_tile_bytes // max(per_image_bytes, 1))
    if B >= 2:
        cap = min(cap, B // 2)          # keep >= 2 grid steps (v7x dual-TC + pipelining)
    cap = max(1, min(cap, B))
    tb = 1
    for d in range(1, cap + 1):
        if B % d == 0:
            tb = d                      # divisor of B -> no partial blocks
    return tb


def se_block(x_nchw, w1, b1, alpha, w2, b2):
    """x_nchw: (B, C, H, W). Torch Linear weights: w1 (hid, C), w2 (C, hid)."""
    B, C, H, W = x_nchw.shape
    HW = H * W
    hid = w1.shape[0]

    # Free metadata reshape; no HBM-side pad, no post-kernel slice.
    x_flat = x_nchw.reshape(B, C, HW)

    # Pre-transpose weights once in the wrapper (removes in-kernel XLU work).
    w1_t = jnp.transpose(w1)              # (C, hid)
    w2_t = jnp.transpose(w2)              # (hid, C)
    b1_2d = b1.reshape(1, hid)
    b2_2d = b2.reshape(1, C)
    alpha_1d = jnp.asarray(alpha, jnp.float32).reshape(1)

    # Batch tile: ~1 MiB x tiles, grid >= 2 when possible.
    x_bytes = jnp.dtype(x_nchw.dtype).itemsize
    per_image_bytes = C * HW * x_bytes
    TB = _pick_batch_tile(B, per_image_bytes)
    grid = (B // TB,)

    # Scoped-VMEM budget: double-buffered x + out tiles, params, headroom.
    tile_bytes = TB * per_image_bytes
    param_bytes = sum(int(a.size) * jnp.dtype(a.dtype).itemsize
                      for a in (w1_t, b1_2d, w2_t, b2_2d))
    needed = 4 * tile_bytes + 4 * param_bytes + (2 << 20)
    vmem_limit = int(min(max(needed, 4 << 20), 32 << 20))

    kernel = functools.partial(se_block_kernel, inv_hw=1.0 / float(HW))

    out_flat = pl.pallas_call(
        kernel,
        out_shape=jax.ShapeDtypeStruct((B, C, HW), x_nchw.dtype),
        grid=grid,
        in_specs=[
            pl.BlockSpec(memory_space=pltpu.MemorySpace.SMEM),       # alpha (scalar)
            pl.BlockSpec((TB, C, HW), lambda b: (b, 0, 0)),          # x (batch tile)
            pl.BlockSpec((C, hid), lambda b: (0, 0)),                # w1^T (resident)
            pl.BlockSpec((1, hid), lambda b: (0, 0)),                # b1
            pl.BlockSpec((hid, C), lambda b: (0, 0)),                # w2^T (resident)
            pl.BlockSpec((1, C), lambda b: (0, 0)),                  # b2
        ],
        out_specs=pl.BlockSpec((TB, C, HW), lambda b: (b, 0, 0)),
        compiler_params=pltpu.CompilerParams(
            dimension_semantics=("parallel",),
            vmem_limit_bytes=vmem_limit),
    )(alpha_1d, x_flat, w1_t, b1_2d, w2_t, b2_2d)

    return out_flat.reshape(B, C, H, W)


def se_block_ref(x, w1, b1, alpha, w2, b2):
    """Pure-JAX reference matching the PyTorch module."""
    y = jnp.mean(x, axis=(2, 3))                       # (B, C)
    h = y @ w1.T + b1
    h = jnp.where(h > 0, h, alpha * h)
    s = jax.nn.sigmoid(h @ w2.T + b2)
    return x * s[:, :, None, None]


if __name__ == "__main__":
    B, C, H, W = 4, 32, 16, 16
    reduction = 16
    hid = C // reduction                                # = 2

    key = jax.random.PRNGKey(0)
    kx, k1, kb1, k2, kb2 = jax.random.split(key, 5)

    x = jax.random.normal(kx, (B, C, H, W), dtype=jnp.float32)
    # Deterministic synthetic parameters (shapes match nn.Linear(out, in)).
    w1 = jax.random.normal(k1, (hid, C), dtype=jnp.float32) * 0.1
    b1 = jax.random.normal(kb1, (hid,), dtype=jnp.float32) * 0.1
    w2 = jax.random.normal(k2, (C, hid), dtype=jnp.float32) * 0.1
    b2 = jax.random.normal(kb2, (C,), dtype=jnp.float32) * 0.1
    alpha = 0.25                                        # PReLU default init

    out = se_block(x, w1, b1, alpha, w2, b2)
    out = jax.block_until_ready(out)

    ref = se_block_ref(x, w1, b1, alpha, w2, b2)
    assert out.shape == (B, C, H, W)
    assert jnp.allclose(out, ref, atol=1e-5, rtol=1e-5), "mismatch vs reference"

    print("KERNEL_OK")
</pallas_src>

<mosaic_0001>
module attributes {stable_mosaic.version = 11 : i64} {
  func.func @se_block_kernel(%arg0: i32, %arg1: memref<1xf32, #tpu.memory_space<smem>>, %arg2: memref<2x32x256xf32, #tpu.memory_space<vmem>>, %arg3: memref<32x2xf32, #tpu.memory_space<vmem>>, %arg4: memref<1x2xf32, #tpu.memory_space<vmem>>, %arg5: memref<2x32xf32, #tpu.memory_space<vmem>>, %arg6: memref<1x32xf32, #tpu.memory_space<vmem>>, %arg7: memref<2x32x256xf32, #tpu.memory_space<vmem>>) attributes {dimension_semantics = [#tpu.dimension_semantics<parallel>], iteration_bounds = array<i64: 2>, scalar_prefetch = 0 : i64, scratch_operands = 0 : i64, tpu.core_type = #tpu.core_type<tc>, window_params = [{transform_indices = @transform_0, window_bounds = array<i64: 1>}, {transform_indices = @transform_1, window_bounds = array<i64: 2, 32, 256>}, {pipeline_mode = #tpu.pipeline_mode<synchronous>, transform_indices = @transform_2, window_bounds = array<i64: 32, 2>}, {pipeline_mode = #tpu.pipeline_mode<synchronous>, transform_indices = @transform_3, window_bounds = array<i64: 1, 2>}, {pipeline_mode = #tpu.pipeline_mode<synchronous>, transform_indices = @transform_4, window_bounds = array<i64: 2, 32>}, {pipeline_mode = #tpu.pipeline_mode<synchronous>, transform_indices = @transform_5, window_bounds = array<i64: 1, 32>}, {transform_indices = @transform_6, window_bounds = array<i64: 2, 32, 256>}]} {
    %c0 = arith.constant 0 : index
    %c0_0 = arith.constant 0 : index
    %c0_1 = arith.constant 0 : index
    %0 = vector.load %arg2[%c0, %c0_0, %c0_1] : memref<2x32x256xf32, #tpu.memory_space<vmem>>, vector<2x32x256xf32>
    %cst = arith.constant dense<0.000000e+00> : vector<2x32xf32>
    %1 = vector.multi_reduction <add>, %0, %cst [2] : vector<2x32x256xf32> to vector<2x32xf32>
    %cst_2 = arith.constant 3.906250e-03 : f32
    %2 = vector.broadcast %cst_2 : f32 to vector<2x32xf32>
    %3 = arith.mulf %1, %2 : vector<2x32xf32>
    %c0_3 = arith.constant 0 : index
    %c0_4 = arith.constant 0 : index
    %4 = vector.load %arg3[%c0_3, %c0_4] : memref<32x2xf32, #tpu.memory_space<vmem>>, vector<32x2xf32>
    %cst_5 = arith.constant dense<0.000000e+00> : vector<2x2xf32>
    %5 = tpu.matmul %3, %4, %cst_5 {dimension_numbers = #tpu.dot_dimension_numbers<[1], [0], [0], [1], [0, 0, 1, 1], [], []>} : vector<2x32xf32>, vector<32x2xf32>, vector<2x2xf32> -> vector<2x2xf32>
    %c0_6 = arith.constant 0 : index
    %c0_7 = arith.constant 0 : index
    %6 = vector.load %arg4[%c0_6, %c0_7] : memref<1x2xf32, #tpu.memory_space<vmem>>, vector<1x2xf32>
    %7 = vector.broadcast %6 : vector<1x2xf32> to vector<2x2xf32>
    %8 = arith.addf %5, %7 : vector<2x2xf32>
    %c0_8 = arith.constant 0 : index
    %9 = memref.load %arg1[%c0_8] : memref<1xf32, #tpu.memory_space<smem>>
    %cst_9 = arith.constant 0.000000e+00 : f32
    %10 = vector.broadcast %cst_9 : f32 to vector<2x2xf32>
    %11 = arith.cmpf ogt, %8, %10 : vector<2x2xf32>
    %12 = vector.broadcast %9 : f32 to vector<2x2xf32>
    %13 = arith.mulf %12, %8 : vector<2x2xf32>
    %14 = arith.select %11, %8, %13 : vector<2x2xi1>, vector<2x2xf32>
    %c0_10 = arith.constant 0 : index
    %c0_11 = arith.constant 0 : index
    %15 = vector.load %arg5[%c0_10, %c0_11] : memref<2x32xf32, #tpu.memory_space<vmem>>, vector<2x32xf32>
    %cst_12 = arith.constant dense<0.000000e+00> : vector<2x32xf32>
    %16 = tpu.matmul %14, %15, %cst_12 {dimension_numbers = #tpu.dot_dimension_numbers<[1], [0], [0], [1], [0, 0, 1, 1], [], []>} : vector<2x2xf32>, vector<2x32xf32>, vector<2x32xf32> -> vector<2x32xf32>
    %c0_13 = arith.constant 0 : index
    %c0_14 = arith.constant 0 : index
    %17 = vector.load %arg6[%c0_13, %c0_14] : memref<1x32xf32, #tpu.memory_space<vmem>>, vector<1x32xf32>
    %18 = vector.broadcast %17 : vector<1x32xf32> to vector<2x32xf32>
    %19 = arith.addf %16, %18 : vector<2x32xf32>
    %20 = arith.negf %19 : vector<2x32xf32>
    %21 = math.exp %20 : vector<2x32xf32>
    %cst_15 = arith.constant 1.000000e+00 : f32
    %22 = vector.broadcast %cst_15 : f32 to vector<2x32xf32>
    %23 = arith.addf %22, %21 : vector<2x32xf32>
    %24 = arith.divf %22, %23 : vector<2x32xf32>
    %25 = vector.shape_cast %24 : vector<2x32xf32> to vector<2x32x1xf32>
    %26 = vector.broadcast %25 : vector<2x32x1xf32> to vector<2x32x256xf32>
    %27 = arith.mulf %0, %26 : vector<2x32x256xf32>
    %c0_16 = arith.constant 0 : index
    %c0_17 = arith.constant 0 : index
    %c0_18 = arith.constant 0 : index
    %28 = vector.load %arg7[%c0_16, %c0_17, %c0_18] : memref<2x32x256xf32, #tpu.memory_space<vmem>>, vector<2x32x256xf32>
    tpu.vector_store %arg7[%c0_16, %c0_17, %c0_18], %27 {strides = array<i32>} : memref<2x32x256xf32, #tpu.memory_space<vmem>>, vector<2x32x256xf32>,
    return
  }
  func.func @transform_0(%arg0: i32) -> i32 {
    %c0_i32 = arith.constant 0 : i32
    %c0_i32_0 = arith.constant 0 : i32
    return %c0_i32 : i32
  }
  func.func @transform_1(%arg0: i32) -> (i32, i32, i32) {
    %c0_i32 = arith.constant 0 : i32
    %c0_i32_0 = arith.constant 0 : i32
    %c0_i32_1 = arith.constant 0 : i32
    return %arg0, %c0_i32, %c0_i32_0 : i32, i32, i32
  }
  func.func @transform_2(%arg0: i32) -> (i32, i32) {
    %c0_i32 = arith.constant 0 : i32
    %c0_i32_0 = arith.constant 0 : i32
    %c0_i32_1 = arith.constant 0 : i32
    return %c0_i32, %c0_i32_0 : i32, i32
  }
  func.func @transform_3(%arg0: i32) -> (i32, i32) {
    %c0_i32 = arith.constant 0 : i32
    %c0_i32_0 = arith.constant 0 : i32
    %c0_i32_1 = arith.constant 0 : i32
    return %c0_i32, %c0_i32_0 : i32, i32
  }
  func.func @transform_4(%arg0: i32) -> (i32, i32) {
    %c0_i32 = arith.constant 0 : i32
    %c0_i32_0 = arith.constant 0 : i32
    %c0_i32_1 = arith.constant 0 : i32
    return %c0_i32, %c0_i32_0 : i32, i32
  }
  func.func @transform_5(%arg0: i32) -> (i32, i32) {
    %c0_i32 = arith.constant 0 : i32
    %c0_i32_0 = arith.constant 0 : i32
    %c0_i32_1 = arith.constant 0 : i32
    return %c0_i32, %c0_i32_0 : i32, i32
  }
  func.func @transform_6(%arg0: i32) -> (i32, i32, i32) {
    %c0_i32 = arith.constant 0 : i32
    %c0_i32_0 = arith.constant 0 : i32
    %c0_i32_1 = arith.constant 0 : i32
    return %arg0, %c0_i32, %c0_i32_0 : i32, i32, i32
  }
}

</mosaic_0001>

<llo_original>
// kernel: tpu_custom_call.1
$region0: #{tpu_custom_call.1}
  #allocation0 [shape = 'u32[]', space=smem, size = 0x4, offset = 0x4, fixed_abs, tag = 'smem constant byte address 0x4 - core index']
  #allocation1 [shape = 'u32[144,128]{1,0:T(1,128)}', space=vmem, size = 0x12000, scoped, tag = 'internal scratch']
  #allocation2 [shape = 'f32[1]{0:T(128)S(6)}', space=smem, size = 0x200, scoped, tag = 'scoped memory for tpu_custom_call.1']
  %s0 = inlined_call_operand.<no memory space> [shape: f32[1], index: 0, kind: input, shape index: {}]
  %s1 = inlined_call_operand.hbm [shape: f32[4,32,256], index: 1, kind: input, shape index: {}]
  %s2 = inlined_call_operand.vmem [shape: f32[32,2], index: 2, kind: input, shape index: {}]
  %s3 = inlined_call_operand.vmem [shape: f32[1,2], index: 3, kind: input, shape index: {}]
  %s4 = inlined_call_operand.vmem [shape: f32[2,32], index: 4, kind: input, shape index: {}]
  %s5 = inlined_call_operand.vmem [shape: f32[1,32], index: 5, kind: input, shape index: {}]
  %s6 = inlined_call_operand.hbm [shape: f32[4,32,256], index: 6, kind: output, shape index: {}]
  %s7 = sld [smem:[#allocation0]]
  $region61: #{tpu_custom_call.1} parent=0
    _
  %s9 = ssub.s32 1, %s7
  %s10 = scalar_select 0, %s9, %s7
  %11 = sst [smem:[#allocation2]] %s0
  $region1: #{tpu_custom_call.1} parent=0
    #allocation3 [shape = 'u8[131072]{0}', space=vmem, size = 0x20000, scoped, tag = 'input window, operand 1']
    #allocation4 [shape = 's32[2]{0}', space=sflag, size = 0x8, scoped, tag = 'scoped memory for tpu_custom_call.1']
    #allocation5 [shape = 's32[2]{0}', space=sflag, size = 0x8, scoped, tag = 'scoped memory for tpu_custom_call.1']
    #allocation6 [shape = 'u8[131072]{0}', space=vmem, size = 0x20000, scoped, tag = 'output window, operand 0']
    %12 = vsyncpa [#allocation4], 0
    %s13 = scalar_lea.sflag [#allocation4], 1
    %14 = vsyncpa %s13, 0
    %15 = vsyncpa [#allocation5], 0
    %s16 = scalar_lea.sflag [#allocation5], 1
    %17 = vsyncpa %s16, 0
    loop: start=0, step=1, limit=4
    $region2: #{tpu_custom_call.1} parent=1 // loop_pre_header
      _
    $region3: #{tpu_custom_call.1} parent=1 // loop_header
      %s19 = sphi 0, %s23
      %p20 = scmp.ge.s32.totalorder %s19, 4
      %s27 = sphi 0, %s27
      %s29 = sphi 0, %s27
      %s30 = sphi 0, %s29
      %s44 = sphi 0, %s30
      %s50 = sphi 0, %s52
      %s53 = sphi 0, %s50
      %s54 = sphi 0, %s53
      %s70 = sphi 0, %s54
      %s74 = sphi 0, %s74
      %s76 = sphi 0, %s74
      %s77 = sphi 0, %s76
      %s91 = sphi 0, %s77
      %s95 = sphi 0, %s95
      %s97 = sphi 0, %s95
      %s98 = sphi 0, %s97
      %s112 = sphi 0, %s98
      %s116 = sphi 0, %s116
      %s118 = sphi 0, %s116
      %s119 = sphi 0, %s118
      %s133 = sphi 0, %s119
      %s137 = sphi 0, %s137
      %s139 = sphi 0, %s137
      %s140 = sphi 0, %s139
      %s154 = sphi 0, %s140
      %s160 = sphi 0, %s162
      %s163 = sphi 0, %s160
      %s164 = sphi 0, %s163
      %s180 = sphi 0, %s164
    $region4: #{tpu_custom_call.1} parent=1 // loop_header_branch
      %22 = sbr.rel (%p20) target = $region8
    $region5: #{tpu_custom_call.1} parent=1 // loop_body
      %s24 = ssub.s32 %s19, 1
      %s25 = ssub.s32 %s19, 2
      %s26 = sadd.s32 %s19, 1
      %s28 = sadd.s32 %s27, 1
      %p31 = scmp.eq.s32.totalorder %s19, 1
      %p32 = scmp.ne.s32.totalorder %s27, %s29
      %p33 = scmp.eq.s32.totalorder %s19, 0
      %p34 = por %p32, %p33
      %p35 = scmp.ne.s32.totalorder %s27, %s29
      %p36 = scmp.eq.s32.totalorder %s24, 1
      %p37 = por %p35, %p36
      %p38 = scmp.ne.s32.totalorder %s29, %s30
      %p39 = scmp.eq.s32.totalorder %s24, 0
      %p40 = por %p38, %p39
      %p41 = scmp.ne.s32.totalorder %s29, %s30
      %p42 = scmp.eq.s32.totalorder %s25, 1
      %p43 = por %p41, %p42
      %p45 = scmp.ne.s32.totalorder %s30, %s44
      %p46 = scmp.eq.s32.totalorder %s25, 0
      %p47 = por %p45, %p46
      %s48 = ssub.s32 %s19, %s26
      %p49 = scmp.eq.s32.totalorder %s48, 0
      %s51 = sadd.s32 %s50, 1
      %s52 = scalar_select %p49, %s50, %s51
      %p55 = pneg %p49
      %p56 = scmp.eq.s32.totalorder %s19, 1
      %p57 = por %p55, %p56
      %p58 = scmp.ne.s32.totalorder %s50, %s53
      %p59 = scmp.eq.s32.totalorder %s19, 0
      %p60 = por %p58, %p59
      %p61 = scmp.ne.s32.totalorder %s50, %s53
      %p62 = scmp.eq.s32.totalorder %s24, 1
      %p63 = por %p61, %p62
      %p64 = scmp.ne.s32.totalorder %s53, %s54
      %p65 = scmp.eq.s32.totalorder %s24, 0
      %p66 = por %p64, %p65
      %p67 = scmp.ne.s32.totalorder %s53, %s54
      %p68 = scmp.eq.s32.totalorder %s25, 1
      %p69 = por %p67, %p68
      %p71 = scmp.ne.s32.totalorder %s54, %s70
      %p72 = scmp.eq.s32.totalorder %s25, 0
      %p73 = por %p71, %p72
      %s75 = sadd.s32 %s74, 1
      %p78 = scmp.eq.s32.totalorder %s19, 1
      %p79 = scmp.ne.s32.totalorder %s74, %s76
      %p80 = scmp.eq.s32.totalorder %s19, 0
      %p81 = por %p79, %p80
      %p82 = scmp.ne.s32.totalorder %s74, %s76
      %p83 = scmp.eq.s32.totalorder %s24, 1
      %p84 = por %p82, %p83
      %p85 = scmp.ne.s32.totalorder %s76, %s77
      %p86 = scmp.eq.s32.totalorder %s24, 0
      %p87 = por %p85, %p86
      %p88 = scmp.ne.s32.totalorder %s76, %s77
      %p89 = scmp.eq.s32.totalorder %s25, 1
      %p90 = por %p88, %p89
      %p92 = scmp.ne.s32.totalorder %s77, %s91
      %p93 = scmp.eq.s32.totalorder %s25, 0
      %p94 = por %p92, %p93
      %s96 = sadd.s32 %s95, 1
      %p99 = scmp.eq.s32.totalorder %s19, 1
      %p100 = scmp.ne.s32.totalorder %s95, %s97
      %p101 = scmp.eq.s32.totalorder %s19, 0
      %p102 = por %p100, %p101
      %p103 = scmp.ne.s32.totalorder %s95, %s97
      %p104 = scmp.eq.s32.totalorder %s24, 1
      %p105 = por %p103, %p104
      %p106 = scmp.ne.s32.totalorder %s97, %s98
      %p107 = scmp.eq.s32.totalorder %s24, 0
      %p108 = por %p106, %p107
      %p109 = scmp.ne.s32.totalorder %s97, %s98
      %p110 = scmp.eq.s32.totalorder %s25, 1
      %p111 = por %p109, %p110
      %p113 = scmp.ne.s32.totalorder %s98, %s112
      %p114 = scmp.eq.s32.totalorder %s25, 0
      %p115 = por %p113, %p114
      %s117 = sadd.s32 %s116, 1
      %p120 = scmp.eq.s32.totalorder %s19, 1
      %p121 = scmp.ne.s32.totalorder %s116, %s118
      %p122 = scmp.eq.s32.totalorder %s19, 0
      %p123 = por %p121, %p122
      %p124 = scmp.ne.s32.totalorder %s116, %s118
      %p125 = scmp.eq.s32.totalorder %s24, 1
      %p126 = por %p124, %p125
      %p127 = scmp.ne.s32.totalorder %s118, %s119
      %p128 = scmp.eq.s32.totalorder %s24, 0
      %p129 = por %p127, %p128
      %p130 = scmp.ne.s32.totalorder %s118, %s119
      %p131 = scmp.eq.s32.totalorder %s25, 1
      %p132 = por %p130, %p131
      %p134 = scmp.ne.s32.totalorder %s119, %s133
      %p135 = scmp.eq.s32.totalorder %s25, 0
      %p136 = por %p134, %p135
      %s138 = sadd.s32 %s137, 1
      %p141 = scmp.eq.s32.totalorder %s19, 1
      %p142 = scmp.ne.s32.totalorder %s137, %s139
      %p143 = scmp.eq.s32.totalorder %s19, 0
      %p144 = por %p142, %p143
      %p145 = scmp.ne.s32.totalorder %s137, %s139
      %p146 = scmp.eq.s32.totalorder %s24, 1
      %p147 = por %p145, %p146
      %p148 = scmp.ne.s32.totalorder %s139, %s140
      %p149 = scmp.eq.s32.totalorder %s24, 0
      %p150 = por %p148, %p149
      %p151 = scmp.ne.s32.totalorder %s139, %s140
      %p152 = scmp.eq.s32.totalorder %s25, 1
      %p153 = por %p151, %p152
      %p155 = scmp.ne.s32.totalorder %s140, %s154
      %p156 = scmp.eq.s32.totalorder %s25, 0
      %p157 = por %p155, %p156
      %s158 = ssub.s32 %s19, %s26
      %p159 = scmp.eq.s32.totalorder %s158, 0
      %s161 = sadd.s32 %s160, 1
      %s162 = scalar_select %p159, %s160, %s161
      %p165 = pneg %p159
      %p166 = scmp.eq.s32.totalorder %s19, 1
      %p167 = por %p165, %p166
      %p168 = scmp.ne.s32.totalorder %s160, %s163
      %p169 = scmp.eq.s32.totalorder %s19, 0
      %p170 = por %p168, %p169
      %p171 = scmp.ne.s32.totalorder %s160, %s163
      %p172 = scmp.eq.s32.totalorder %s24, 1
      %p173 = por %p171, %p172
      %p174 = scmp.ne.s32.totalorder %s163, %s164
      %p175 = scmp.eq.s32.totalorder %s24, 0
      %p176 = por %p174, %p175
      %p177 = scmp.ne.s32.totalorder %s163, %s164
      %p178 = scmp.eq.s32.totalorder %s25, 1
      %p179 = por %p177, %p178
      %p181 = scmp.ne.s32.totalorder %s164, %s180
      %p182 = scmp.eq.s32.totalorder %s25, 0
      %p183 = por %p181, %p182
      %p184 = scmp.le.s32.totalorder 1, %s19
      %p185 = scmp.lt.s32.totalorder %s19, 3
      %p186 = pnand %p184, %p185
      %p187 = pneg %p186
      // Predicated region
      $region9: #{tpu_custom_call.1} parent=5 // pred_check
        _
      $region10: #{tpu_custom_call.1} parent=5 // pred_check_branch
        %189 = sbr.rel (%p186) target = $region12
      $region11: #{tpu_custom_call.1} parent=5 // pred_region
        %s190 = ssub.s32 %s19, 1
        // Predicated region
        $region13: #{tpu_custom_call.1} parent=11 // pred_check
          %p191 = pneg %p40
        $region14: #{tpu_custom_call.1} parent=11 // pred_check_branch
          %193 = sbr.rel (%p191) target = $region16
        $region15: #{tpu_custom_call.1} parent=11 // pred_region
          _
        $region16: #{tpu_custom_call.1} parent=11 // pred_fallthru
          _
        // Predicated region
        $region17: #{tpu_custom_call.1} parent=11 // pred_check
          %p194 = pneg %p87
        $region18: #{tpu_custom_call.1} parent=11 // pred_check_branch
          %196 = sbr.rel (%p194) target = $region20
        $region19: #{tpu_custom_call.1} parent=11 // pred_region
          _
        $region20: #{tpu_custom_call.1} parent=11 // pred_fallthru
          _
        // Predicated region
        $region21: #{tpu_custom_call.1} parent=11 // pred_check
          %p197 = pneg %p108
        $region22: #{tpu_custom_call.1} parent=11 // pred_check_branch
          %199 = sbr.rel (%p197) target = $region24
        $region23: #{tpu_custom_call.1} parent=11 // pred_region
          _
        $region24: #{tpu_custom_call.1} parent=11 // pred_fallthru
          _
        // Predicated region
        $region25: #{tpu_custom_call.1} parent=11 // pred_check
          %p200 = pneg %p129
        $region26: #{tpu_custom_call.1} parent=11 // pred_check_branch
          %202 = sbr.rel (%p200) target = $region28
        $region27: #{tpu_custom_call.1} parent=11 // pred_region
          _
        $region28: #{tpu_custom_call.1} parent=11 // pred_fallthru
          _
        // Predicated region
        $region29: #{tpu_custom_call.1} parent=11 // pred_check
          %p203 = pneg %p150
        $region30: #{tpu_custom_call.1} parent=11 // pred_check_branch
          %205 = sbr.rel (%p203) target = $region32
        $region31: #{tpu_custom_call.1} parent=11 // pred_region
          _
        $region32: #{tpu_custom_call.1} parent=11 // pred_fallthru
          _
      $region12: #{tpu_custom_call.1} parent=5 // pred_fallthru
        _
      %p206 = scmp.lt.s32.totalorder %s19, 2
      // Predicated region
      $region33: #{tpu_custom_call.1} parent=5 // pred_check
        %p207 = pneg %p206
      $region34: #{tpu_custom_call.1} parent=5 // pred_check_branch
        %209 = sbr.rel (%p207) target = $region36
      $region35: #{tpu_custom_call.1} parent=5 // pred_region
        // Predicated region
        $region37: #{tpu_custom_call.1} parent=35 // pred_check
          %p210 = pneg %p60
        $region38: #{tpu_custom_call.1} parent=35 // pred_check_branch
          %212 = sbr.rel (%p210) target = $region40
        $region39: #{tpu_custom_call.1} parent=35 // pred_region
          %s213 = sand.u32 %s50, 1
          %s214 = scalar_lea.sflag [#allocation4], %s213
          %s215 = sand.u32 %s50, 1
          %s216 = smul.addr %s215, 128
          %s217 = scalar_lea.vmem [#allocation3], %s216
          %s218 = smul.u32 2, %s19
          %s220 = ssub.s32 2048, 2048
          %221 = vsyncadd %s214, %s220
          %s222 = smul.addr %s218, 8
          %s223 = smul.addr %s222, 128
          %s224 = scalar_lea.hbm %s1, %s223
          %s225 = sshll.u32 %s217, 4
          %s226 = int_to_ptr.vmem [resolvable:$true] %s225
          %231 = dma.hbm_to_vmem [thread:$0]  %s224, 2048, %s226, %s214, 256, 256, 16
        $region40: #{tpu_custom_call.1} parent=35 // pred_fallthru
          _
      $region36: #{tpu_custom_call.1} parent=5 // pred_fallthru
        _
      %p232 = scmp.le.s32.totalorder 1, %s19
      %p233 = scmp.lt.s32.totalorder %s19, 3
      %p234 = pnand %p232, %p233
      %p235 = pneg %p234
      // Predicated region
      $region41: #{tpu_custom_call.1} parent=5 // pred_check
        _
      $region42: #{tpu_custom_call.1} parent=5 // pred_check_branch
        %237 = sbr.rel (%p234) target = $region44
      $region43: #{tpu_custom_call.1} parent=5 // pred_region
        %s238 = ssub.s32 %s19, 1
        %s239 = sand.u32 %s53, 1
        %s240 = scalar_lea.sflag [#allocation4], %s239
        %s241 = sand.u32 %s53, 1
        %s242 = smul.addr %s241, 128
        %s243 = scalar_lea.vmem [#allocation3], %s242
        // Predicated region
        $region45: #{tpu_custom_call.1} parent=43 // pred_check
          %p244 = pneg %p66
        $region46: #{tpu_custom_call.1} parent=43 // pred_check_branch
          %246 = sbr.rel (%p244) target = $region48
        $region47: #{tpu_custom_call.1} parent=43 // pred_region
          %247 = dma.done %s240, 2048
        $region48: #{tpu_custom_call.1} parent=43 // pred_fallthru
          _
        %p248 = pneg %p40
        %p249 = pneg %p37
        %s250 = sand.u32 %s53, 1
        %s251 = scalar_lea.sflag [#allocation4], %s250
        %s252 = sand.u32 %s53, 1
        %s253 = smul.addr %s252, 128
        %s254 = scalar_lea.vmem [#allocation3], %s253
        %p255 = pneg %p66
        %p256 = pneg %p63
        %p257 = pneg %p87
        %p258 = pneg %p84
        %p259 = pneg %p108
        %p260 = pneg %p105
        %p261 = pneg %p129
        %p262 = pneg %p126
        %p263 = pneg %p150
        %p264 = pneg %p147
        %p265 = pneg %p176
        %p266 = pneg %p173
        %s267 = sand.u32 %s163, 1
        %s268 = scalar_lea.sflag [#allocation5], %s267
        %s269 = sand.u32 %s163, 1
        %s270 = smul.addr %s269, 128
        %s271 = scalar_lea.vmem [#allocation6], %s270
        %s272 = smul.u32 2, %s24
        %s273 = smul.u32 2, %s24
        %v274 = vld [vmem:[%s243] sm:$0xff]
        %v275 = vld [vmem:[%s243 + $0x8] sm:$0xff]
        %v276 = vld [vmem:[%s243 + $0x10] sm:$0xff]
        %v277 = vld [vmem:[%s243 + $0x18] sm:$0xff]
        %v278 = vld [vmem:[%s243 + $0x20] sm:$0xff]
        %v279 = vld [vmem:[%s243 + $0x28] sm:$0xff]
        %v280 = vld [vmem:[%s243 + $0x30] sm:$0xff]
        %v281 = vld [vmem:[%s243 + $0x38] sm:$0xff]
        %v282 = vld [vmem:[%s243 + $0x40] sm:$0xff]
        %v283 = vld [vmem:[%s243 + $0x48] sm:$0xff]
        %v284 = vld [vmem:[%s243 + $0x50] sm:$0xff]
        %v285 = vld [vmem:[%s243 + $0x58] sm:$0xff]
        %v286 = vld [vmem:[%s243 + $0x60] sm:$0xff]
        %v287 = vld [vmem:[%s243 + $0x68] sm:$0xff]
        %v288 = vld [vmem:[%s243 + $0x70] sm:$0xff]
        %v289 = vld [vmem:[%s243 + $0x78] sm:$0xff]
        %v290 = vadd.f32 %v274, %v275
        %291 = vadd.xlane.f32.xlu0 %v290
        %v292 = vpop.xlane.xlu0 %291
        %v293 = vadd.f32 %v276, %v277
        %294 = vadd.xlane.f32.xlu0 %v293
        %v295 = vpop.xlane.xlu0 %294
        %v296 = vadd.f32 %v278, %v279
        %297 = vadd.xlane.f32.xlu0 %v296
        %v298 = vpop.xlane.xlu0 %297
        %v299 = vadd.f32 %v280, %v281
        %300 = vadd.xlane.f32.xlu0 %v299
        %v301 = vpop.xlane.xlu0 %300
        %v302 = vadd.f32 %v282, %v283
        %303 = vadd.xlane.f32.xlu0 %v302
        %v304 = vpop.xlane.xlu0 %303
        %v305 = vadd.f32 %v284, %v285
        %306 = vadd.xlane.f32.xlu0 %v305
        %v307 = vpop.xlane.xlu0 %306
        %v308 = vadd.f32 %v286, %v287
        %309 = vadd.xlane.f32.xlu0 %v308
        %v310 = vpop.xlane.xlu0 %309
        %v311 = vadd.f32 %v288, %v289
        %312 = vadd.xlane.f32.xlu0 %v311
        %v313 = vpop.xlane.xlu0 %312
        %v314 = vmul.f32 %v292, 0.00390625
        %v315 = vmul.f32 %v295, 0.00390625
        %v316 = vmul.f32 %v298, 0.00390625
        %v317 = vmul.f32 %v301, 0.00390625
        %v318 = vmul.f32 %v304, 0.00390625
        %v319 = vmul.f32 %v307, 0.00390625
        %v320 = vmul.f32 %v310, 0.00390625
        %v321 = vmul.f32 %v313, 0.00390625
        %v322 = vld [vmem:[%s2] sm:$0xff]
        %v323 = vld [vmem:[%s2 + $0x8] sm:$0xff]
        %v324 = vld [vmem:[%s2 + $0x10] sm:$0xff]
        %v325 = vld [vmem:[%s2 + $0x18] sm:$0xff]
        %v326 = vld [vmem:[%s3] sm:$0x1]
        %v328 = vlaneseq
        %v329 = vshrl.u32 %v328, 7
        %v330 = vsub.s32 0, %v329
        %v331 = vrot.slane %v326, %v330
        %v341 = vlaneseq
        %v342 = vand.u32 %v341, 127
        %v343 = vlaneseq
        %v344 = vshrl.u32 %v343, 7
        %v345 = vsub.s32 %v342, %v344
        %v346 = vrot.slane %v314, %v345
        %v347 = vadd.s32 %v342, 4294967288
        %v348 = vlaneseq
        %v349 = vshrl.u32 %v348, 7
        %v350 = vsub.s32 %v347, %v349
        %v351 = vrot.slane %v315, %v350
        %vm352 = vcmask 130112
        %v353 = vsel %vm352, %v351, %v346
        %v354 = vadd.s32 %v342, 4294967280
        %v355 = vlaneseq
        %v356 = vshrl.u32 %v355, 7
        %v357 = vsub.s32 %v354, %v356
        %v358 = vrot.slane %v316, %v357
        %vm359 = vcmask 195712
        %v360 = vsel %vm359, %v358, %v353
        %v361 = vadd.s32 %v342, 4294967272
        %v362 = vlaneseq
        %v363 = vshrl.u32 %v362, 7
        %v364 = vsub.s32 %v361, %v363
        %v365 = vrot.slane %v317, %v364
        %vm366 = vcmask 261312
        %v367 = vsel %vm366, %v365, %v360
        %v368 = vlaneseq
        %v369 = vshrl.u32 %v368, 7
        %v370 = vsub.s32 %v342, %v369
        %v371 = vrot.slane %v318, %v370
        %v372 = vlaneseq
        %v373 = vshrl.u32 %v372, 7
        %v374 = vsub.s32 %v347, %v373
        %v375 = vrot.slane %v319, %v374
        %v376 = vsel %vm352, %v375, %v371
        %v377 = vlaneseq
        %v378 = vshrl.u32 %v377, 7
        %v379 = vsub.s32 %v354, %v378
        %v380 = vrot.slane %v320, %v379
        %v381 = vsel %vm359, %v380, %v376
        %v382 = vlaneseq
        %v383 = vshrl.u32 %v382, 7
        %v384 = vsub.s32 %v361, %v383
        %v385 = vrot.slane %v321, %v384
        %v386 = vsel %vm366, %v385, %v381
        %vm387 = vcmask 1041409
        %v388 = vsel %vm387, %v386, %v367
        %vm389 = vcmask 261120
        %v390 = vsel %vm389, %v388, 0
        %392 = vmatprep.subr.mxu0 0.0
        %393 = vmatpush1.msra.mxu0 %v322
        %394 = vmatprep.subr.mxu0 0.0
        %395 = vmatpush1.msra.mxu0 %v323
        %396 = vmatprep.subr.mxu0 0.0
        %397 = vmatpush1.msra.mxu0 %v324
        %398 = vmatprep.subr.mxu0 0.0
        %399 = vmatpush1.msra.mxu0 %v325
        %400 = vmatprep.subr.mxu0 0.0
        %401 = vmatpush1.msra.mxu0 0.0
        %402 = vmatprep.subr.mxu0 0.0
        %403 = vmatpush1.msra.mxu0 0.0
        %404 = vmatprep.subr.mxu0 0.0
        %405 = vmatpush1.msra.mxu0 0.0
        %406 = vmatprep.subr.mxu0 0.0
        %407 = vmatpush1.msra.mxu0 0.0
        %408 = vmatprep.subr.mxu0 0.0
        %409 = vmatpush1.msra.mxu0 0.0
        %410 = vmatprep.subr.mxu0 0.0
        %411 = vmatpush1.msra.mxu0 0.0
        %412 = vmatprep.subr.mxu0 0.0
        %413 = vmatpush1.msra.mxu0 0.0
        %414 = vmatprep.subr.mxu0 0.0
        %415 = vmatpush1.msra.mxu0 0.0
        %416 = vmatprep.subr.mxu0 0.0
        %417 = vmatpush1.msra.mxu0 0.0
        %418 = vmatprep.subr.mxu0 0.0
        %419 = vmatpush1.msra.mxu0 0.0
        %420 = vmatprep.subr.mxu0 0.0
        %421 = vmatpush1.msra.mxu0 0.0
        %422 = vmatprep.subr.mxu0 0.0
        %423 = vmatpush1.msra.mxu0 0.0
        %424 = vmatprep.subr.mxu0 0.0
        %425 = vmatpush1.msra.mxu0 0.0
        %426 = vmatprep.subr.mxu0 0.0
        %427 = vmatpush1.msra.mxu0 0.0
        %428 = vmatprep.subr.mxu0 0.0
        %429 = vmatpush1.msra.mxu0 0.0
        %430 = vmatprep.subr.mxu0 0.0
        %431 = vmatpush1.msra.mxu0 0.0
        %432 = vmatprep.subr.mxu0 0.0
        %433 = vmatpush1.msra.mxu0 0.0
        %434 = vmatprep.subr.mxu0 0.0
        %435 = vmatpush1.msra.mxu0 0.0
        %436 = vmatprep.subr.mxu0 0.0
        %437 = vmatpush1.msra.mxu0 0.0
        %438 = vmatprep.subr.mxu0 0.0
        %439 = vmatpush1.msra.mxu0 0.0
        %440 = vmatprep.subr.mxu0 0.0
        %441 = vmatpush1.msra.mxu0 0.0
        %442 = vmatprep.subr.mxu0 0.0
        %443 = vmatpush1.msra.mxu0 0.0
        %444 = vmatprep.subr.mxu0 0.0
        %445 = vmatpush1.msra.mxu0 0.0
        %446 = vmatprep.subr.mxu0 0.0
        %447 = vmatpush1.msra.mxu0 0.0
        %448 = vmatprep.subr.mxu0 0.0
        %449 = vmatpush1.msra.mxu0 0.0
        %450 = vmatprep.subr.mxu0 0.0
        %451 = vmatpush1.msra.mxu0 0.0
        %452 = vmatprep.subr.mxu0 0.0
        %453 = vmatpush1.msra.mxu0 0.0
        %454 = vmatprep.subr.mxu0 0.0
        %455 = vmatpush1.msra.mxu0 0.0
        %456 = vmatprep.mubr.f32.mxu0 0.0
        %457 = vmatmul.mubr.f32.gmra.mrb[0].mxu0 %v390
        %v458 = vpop.f32.mrb[0].mxu0
        %v459 = vadd.f32 %v331, %v458
        %v460 = vpop.f32.mrb[0].mxu0
        %461 = vdwg.mxu0
        %s462 = sld [smem:[#allocation2]]
        %vm463 = vcmp.gt.f32.partialorder %v459, 0.0
        %v464 = vstv %s462
        %v465 = vmul.f32 %v464, %v459
        %v466 = vsel %vm463, %v459, %v465
        %v467 = vld [vmem:[%s4] sm:$0x3]
        %v468 = vld [vmem:[%s5] sm:$0x1]
        %v470 = vlaneseq
        %v471 = vshrl.u32 %v470, 7
        %v472 = vsub.s32 0, %v471
        %v473 = vrot.slane %v468, %v472
        %vm475 = vcmask 15360
        %v477 = vsel %vm475, %v466, 0
        %vm479 = vcmask 1041408
        %v481 = vsel %vm479, %v467, 0
        %483 = vmatprep.subr.mxu0 0.0
        %484 = vmatpush1.msra.mxu0 %v481
        %485 = vmatprep.subr.mxu0 0.0
        %486 = vmatpush1.msra.mxu0 0.0
        %487 = vmatprep.subr.mxu0 0.0
        %488 = vmatpush1.msra.mxu0 0.0
        %489 = vmatprep.subr.mxu0 0.0
        %490 = vmatpush1.msra.mxu0 0.0
        %491 = vmatprep.subr.mxu0 0.0
        %492 = vmatpush1.msra.mxu0 0.0
        %493 = vmatprep.subr.mxu0 0.0
        %494 = vmatpush1.msra.mxu0 0.0
        %495 = vmatprep.subr.mxu0 0.0
        %496 = vmatpush1.msra.mxu0 0.0
        %497 = vmatprep.subr.mxu0 0.0
        %498 = vmatpush1.msra.mxu0 0.0
        %499 = vmatprep.subr.mxu0 0.0
        %500 = vmatpush1.msra.mxu0 0.0
        %501 = vmatprep.subr.mxu0 0.0
        %502 = vmatpush1.msra.mxu0 0.0
        %503 = vmatprep.subr.mxu0 0.0
        %504 = vmatpush1.msra.mxu0 0.0
        %505 = vmatprep.subr.mxu0 0.0
        %506 = vmatpush1.msra.mxu0 0.0
        %507 = vmatprep.subr.mxu0 0.0
        %508 = vmatpush1.msra.mxu0 0.0
        %509 = vmatprep.subr.mxu0 0.0
        %510 = vmatpush1.msra.mxu0 0.0
        %511 = vmatprep.subr.mxu0 0.0
        %512 = vmatpush1.msra.mxu0 0.0
        %513 = vmatprep.subr.mxu0 0.0
        %514 = vmatpush1.msra.mxu0 0.0
        %515 = vmatprep.subr.mxu0 0.0
        %516 = vmatpush1.msra.mxu0 0.0
        %517 = vmatprep.subr.mxu0 0.0
        %518 = vmatpush1.msra.mxu0 0.0
        %519 = vmatprep.subr.mxu0 0.0
        %520 = vmatpush1.msra.mxu0 0.0
        %521 = vmatprep.subr.mxu0 0.0
        %522 = vmatpush1.msra.mxu0 0.0
        %523 = vmatprep.subr.mxu0 0.0
        %524 = vmatpush1.msra.mxu0 0.0
        %525 = vmatprep.subr.mxu0 0.0
        %526 = vmatpush1.msra.mxu0 0.0
        %527 = vmatprep.subr.mxu0 0.0
        %528 = vmatpush1.msra.mxu0 0.0
        %529 = vmatprep.subr.mxu0 0.0
        %530 = vmatpush1.msra.mxu0 0.0
        %531 = vmatprep.subr.mxu0 0.0
        %532 = vmatpush1.msra.mxu0 0.0
        %533 = vmatprep.subr.mxu0 0.0
        %534 = vmatpush1.msra.mxu0 0.0
        %535 = vmatprep.subr.mxu0 0.0
        %536 = vmatpush1.msra.mxu0 0.0
        %537 = vmatprep.subr.mxu0 0.0
        %538 = vmatpush1.msra.mxu0 0.0
        %539 = vmatprep.subr.mxu0 0.0
        %540 = vmatpush1.msra.mxu0 0.0
        %541 = vmatprep.subr.mxu0 0.0
        %542 = vmatpush1.msra.mxu0 0.0
        %543 = vmatprep.subr.mxu0 0.0
        %544 = vmatpush1.msra.mxu0 0.0
        %545 = vmatprep.subr.mxu0 0.0
        %546 = vmatpush1.msra.mxu0 0.0
        %547 = vmatprep.mubr.f32.mxu0 0.0
        %548 = vmatmul.mubr.f32.gmra.mrb[0].mxu0 %v477
        %v549 = vpop.f32.mrb[0].mxu0
        %v550 = vadd.f32 %v473, %v549
        %v551 = vpop.f32.mrb[0].mxu0
        %552 = vdwg.mxu0
        %v553 = vxor.u32 %v550, 2147483648
        %v554 = vmul.f32 %v553, 1.442695
        %v555 = vpow.pop %v554
        %v556 = vadd.f32 %v555, 1.0
        %v557 = vrcp.pop %v556
        %v558 = vmul.f32 1.0, %v557
        %v559 = vlaneseq
        %v560 = vshrl.u32 %v559, 7
        %v561 = vsub.s32 0, %v560
        %v562 = vrot.slane %v558, %v561
        %564 = vbcast.lane.b32.xlu0 %v562, 256
        %v565 = vpop.permute.xlu0 %564
        %s567 = sor.u32 256, 8
        %568 = vbcast.lane.b32.xlu0 %v562, %s567
        %v569 = vpop.permute.xlu0 %568
        %s571 = sor.u32 256, 16
        %572 = vbcast.lane.b32.xlu0 %v562, %s571
        %v573 = vpop.permute.xlu0 %572
        %s575 = sor.u32 256, 24
        %576 = vbcast.lane.b32.xlu0 %v562, %s575
        %v577 = vpop.permute.xlu0 %576
        %v578 = vlaneseq
        %v579 = vshrl.u32 %v578, 7
        %v580 = vsub.s32 1, %v579
        %v581 = vrot.slane %v558, %v580
        %583 = vbcast.lane.b32.xlu0 %v581, 256
        %v584 = vpop.permute.xlu0 %583
        %s586 = sor.u32 256, 8
        %587 = vbcast.lane.b32.xlu0 %v581, %s586
        %v588 = vpop.permute.xlu0 %587
        %s590 = sor.u32 256, 16
        %591 = vbcast.lane.b32.xlu0 %v581, %s590
        %v592 = vpop.permute.xlu0 %591
        %s594 = sor.u32 256, 24
        %595 = vbcast.lane.b32.xlu0 %v581, %s594
        %v596 = vpop.permute.xlu0 %595
        %v597 = vmul.f32 %v274, %v565
        %v598 = vmul.f32 %v275, %v565
        %v599 = vmul.f32 %v276, %v569
        %v600 = vmul.f32 %v277, %v569
        %v601 = vmul.f32 %v278, %v573
        %v602 = vmul.f32 %v279, %v573
        %v603 = vmul.f32 %v280, %v577
        %v604 = vmul.f32 %v281, %v577
        %v605 = vmul.f32 %v282, %v584
        %v606 = vmul.f32 %v283, %v584
        %v607 = vmul.f32 %v284, %v588
        %v608 = vmul.f32 %v285, %v588
        %v609 = vmul.f32 %v286, %v592
        %v610 = vmul.f32 %v287, %v592
        %v611 = vmul.f32 %v288, %v596
        %v612 = vmul.f32 %v289, %v596
        %613 = vst [vmem:[%s271] sm:$0xff] %v597
        %614 = vst [vmem:[%s271 + $0x8] sm:$0xff] %v598
        %615 = vst [vmem:[%s271 + $0x10] sm:$0xff] %v599
        %616 = vst [vmem:[%s271 + $0x18] sm:$0xff] %v600
        %617 = vst [vmem:[%s271 + $0x20] sm:$0xff] %v601
        %618 = vst [vmem:[%s271 + $0x28] sm:$0xff] %v602
        %619 = vst [vmem:[%s271 + $0x30] sm:$0xff] %v603
        %620 = vst [vmem:[%s271 + $0x38] sm:$0xff] %v604
        %621 = vst [vmem:[%s271 + $0x40] sm:$0xff] %v605
        %622 = vst [vmem:[%s271 + $0x48] sm:$0xff] %v606
        %623 = vst [vmem:[%s271 + $0x50] sm:$0xff] %v607
        %624 = vst [vmem:[%s271 + $0x58] sm:$0xff] %v608
        %625 = vst [vmem:[%s271 + $0x60] sm:$0xff] %v609
        %626 = vst [vmem:[%s271 + $0x68] sm:$0xff] %v610
        %627 = vst [vmem:[%s271 + $0x70] sm:$0xff] %v611
        %628 = vst [vmem:[%s271 + $0x78] sm:$0xff] %v612
        %s629 = sand.u32 %s163, 1
        %s630 = scalar_lea.sflag [#allocation5], %s629
        %s631 = sand.u32 %s163, 1
        %s632 = smul.addr %s631, 128
        %s633 = scalar_lea.vmem [#allocation6], %s632
        // Predicated region
        $region49: #{tpu_custom_call.1} parent=43 // pred_check
          %p634 = pneg %p173
        $region50: #{tpu_custom_call.1} parent=43 // pred_check_branch
          %636 = sbr.rel (%p634) target = $region52
        $region51: #{tpu_custom_call.1} parent=43 // pred_region
          %s637 = smul.u32 2, %s24
          %s639 = ssub.s32 2048, 2048
          %640 = vsyncadd %s630, %s639
          %s641 = smul.addr %s637, 8
          %s642 = smul.addr %s641, 128
          %s643 = scalar_lea.hbm %s6, %s642
          %s644 = sshll.u32 %s633, 4
          %s645 = int_to_ptr.vmem [resolvable:$true] %s644
          %650 = dma.vmem_to_hbm [thread:$0]  %s645, 2048, %s643, %s630, 256, 256, 16
        $region52: #{tpu_custom_call.1} parent=43 // pred_fallthru
          _
      $region44: #{tpu_custom_call.1} parent=5 // pred_fallthru
        _
      %p651 = scmp.le.s32.totalorder 2, %s19
      // Predicated region
      $region53: #{tpu_custom_call.1} parent=5 // pred_check
        %p652 = pneg %p651
      $region54: #{tpu_custom_call.1} parent=5 // pred_check_branch
        %654 = sbr.rel (%p652) target = $region56
      $region55: #{tpu_custom_call.1} parent=5 // pred_region
        %s655 = ssub.s32 %s19, 2
        // Predicated region
        $region57: #{tpu_custom_call.1} parent=55 // pred_check
          %p656 = pneg %p179
        $region58: #{tpu_custom_call.1} parent=55 // pred_check_branch
          %658 = sbr.rel (%p656) target = $region60
        $region59: #{tpu_custom_call.1} parent=55 // pred_region
          %s659 = sand.u32 %s164, 1
          %s660 = scalar_lea.sflag [#allocation5], %s659
          %s661 = sand.u32 %s164, 1
          %s662 = smul.addr %s661, 128
          %s663 = scalar_lea.vmem [#allocation6], %s662
          %664 = dma.done %s660, 2048
        $region60: #{tpu_custom_call.1} parent=55 // pred_fallthru
          _
      $region56: #{tpu_custom_call.1} parent=5 // pred_fallthru
        _
    $region6: #{tpu_custom_call.1} parent=1 // loop_footer
      %s23 = sadd.s32 1, %s19
    $region7: #{tpu_custom_call.1} parent=1 // loop_footer_branch
      %18 = sbr.rel target = $region3
    $region8: #{tpu_custom_call.1} parent=1 // loop_exit
      _
    %665 = vsyncpa [#allocation4], 1
    %s666 = scalar_lea.sflag [#allocation4], 1
    %667 = vsyncpa %s666, 1
    %668 = vsyncpa [#allocation5], 1
    %s669 = scalar_lea.sflag [#allocation5], 1
    %670 = vsyncpa %s669, 1

</llo_original>
